<compile_context>
chip_gen: v5e
topology: v5e:2x2
jax: 0.10.0
libtpu: 0.0.40
codegen_flags: <defaults>
</compile_context>

<pallas_src>
import functools

import jax
import jax.numpy as jnp
from jax.experimental import pallas as pl
from jax.experimental.pallas import tpu as pltpu

IGNORE_INDEX = 92   # default from SARLoss.__init__
_ROW_CHUNK = 128    # in-kernel sub-chunk (rows) to bound f32 temporaries


def _round_up(x, m):
    return ((x + m - 1) // m) * m


def _sar_loss_kernel(logits_ref, targets_ref, out_ref, *, ignore_index, rc,
                     num_chunks):
    # logits_ref : [TN, C]  native dtype (f32/bf16) in VMEM
    # targets_ref: [TN, 1]  int32 in VMEM
    # out_ref    : [1, 8, 128] f32 per-shard accumulator, resident across the
    #              inner "arbitrary" grid axis. sublane 0 = sum of nll,
    #              sublane 1 = count of non-ignored rows.

    @pl.when(pl.program_id(1) == 0)
    def _():
        out_ref[...] = jnp.zeros_like(out_ref)

    c = logits_ref.shape[-1]
    # One iota per tile, reused by every chunk (JAX does not CSE broadcasts).
    col_ids = jax.lax.broadcasted_iota(jnp.int32, (rc, c), 1)

    total = jnp.float32(0.0)
    count = jnp.float32(0.0)
    # Statically unrolled chunk loop; each chunk's [rc, C] temporaries are dead
    # (reduced to scalars) before the next chunk starts, bounding live ranges
    # by dataflow while keeping the large DMA tile.
    for j in range(num_chunks):
        start = j * rc                                            # static slice
        logits = logits_ref[pl.ds(start, rc), :].astype(jnp.float32)  # [rc, C]
        tgt = targets_ref[pl.ds(start, rc), :]                         # [rc, 1]

        # numerically stable logsumexp along the class (lane) dim
        row_max = jnp.max(logits, axis=-1, keepdims=True)              # [rc, 1]
        lse = jnp.log(jnp.sum(jnp.exp(logits - row_max),
                              axis=-1, keepdims=True))                 # [rc, 1]

        # fused gather of the target-class logit (no log_probs / one-hot):
        #   nll = logsumexp(logits) - logits[target]
        gathered = jnp.sum(jnp.where(col_ids == tgt, logits, 0.0),
                           axis=-1, keepdims=True)                     # [rc, 1]
        nll = (row_max + lse) - gathered                               # [rc, 1]

        # Rows whose target == ignore_index (including padded rows and the
        # clamped duplicate rows of fully-padded tiles) contribute nothing;
        # jnp.where keeps garbage logits NaN/Inf-safe.
        valid = tgt != ignore_index                                    # [rc, 1]
        total = total + jnp.sum(jnp.where(valid, nll, 0.0))
        count = count + jnp.sum(valid.astype(jnp.float32))

    # Merge both scalars into one lane-dense (8, 128) slab and accumulate.
    sub_ids = jax.lax.broadcasted_iota(jnp.int32, out_ref.shape, 1)
    update = jnp.where(sub_ids == 0, total,
                       jnp.where(sub_ids == 1, count, 0.0))
    out_ref[...] += update


def sar_loss(predicts, label, *, ignore_index=IGNORE_INDEX, row_tile=2048):
    """JAX/Pallas equivalent of SARLoss.forward.

    predicts: [B, T, C] float (kept in native dtype; cast to f32 in-kernel)
    label:    [B, T]    integer
    returns:  {'loss': scalar f32}
    """
    B, T, C = predicts.shape
    label = label.astype(jnp.int32)
    assert label.ndim == predicts.ndim - 1, (
        "The target's shape and inputs's shape is [N, d] and [N, num_steps]")

    # Time shift done only on the tiny label tensor: logits row (b, t) of the
    # FULL predicts tensor is paired with label[b, t+1]; the dropped last
    # timestep gets ignore_index so it masks itself. Avoids materializing
    # predicts[:, :-1, :] (an extra HBM write+read of the logits).
    shifted_label = jnp.concatenate(
        [label[:, 1:], jnp.full((B, 1), ignore_index, jnp.int32)], axis=1)

    n = B * T
    logits = jnp.reshape(predicts, (n, C))        # free reshape, native dtype
    targets = jnp.reshape(shifted_label, (n,))

    # --- tiling --------------------------------------------------------------
    rc = _ROW_CHUNK
    row_tile = max(rc, _round_up(row_tile, rc))
    if n >= rc:
        tn = min(row_tile, _round_up(n, rc))      # tile rows, multiple of rc
    else:
        tn = _round_up(n, 8)
        rc = tn
    num_chunks = tn // rc

    tiles_total = _round_up(n, tn) // tn
    num_shards = 2 if tiles_total >= 2 else 1     # one shard per TC (v7x)
    tiles_per_shard = _round_up(tiles_total, num_shards) // num_shards
    padded_tiles = num_shards * tiles_per_shard
    padded_n = padded_tiles * tn

    # Pad ONLY the tiny integer target vector; padded rows carry ignore_index
    # and mask themselves (and any clamped duplicate logits rows) in-kernel.
    targets = jnp.pad(targets, (0, padded_n - n),
                      constant_values=ignore_index).reshape(padded_n, 1)

    def logits_map(s, i):
        # Clamp fully out-of-bounds padding tiles back onto the last valid
        # tile so every logits DMA is at least partially in bounds; their
        # targets are all ignore_index so the duplicated rows are masked.
        g = jnp.minimum(s * tiles_per_shard + i, tiles_total - 1)
        return (g, 0)

    def targets_map(s, i):
        return (s * tiles_per_shard + i, 0)

    kernel = functools.partial(_sar_loss_kernel, ignore_index=ignore_index,
                               rc=rc, num_chunks=num_chunks)

    itemsize = jnp.dtype(predicts.dtype).itemsize
    vmem_bytes = (2 * tn * C * itemsize           # double-buffered logits tile
                  + 2 * tn * 4                    # double-buffered targets
                  + 8 * 128 * 4                   # accumulator output block
                  + 6 * rc * C * 4)               # in-kernel f32 chunk temps
    vmem_limit = int(min(48 * 1024 * 1024,        # v7x only has 64 MiB VMEM
                         max(16 * 1024 * 1024, 2 * vmem_bytes)))

    partials = pl.pallas_call(
        kernel,
        out_shape=jax.ShapeDtypeStruct((num_shards, 8, 128), jnp.float32),
        grid_spec=pltpu.PrefetchScalarGridSpec(
            num_scalar_prefetch=0,
            grid=(num_shards, tiles_per_shard),
            in_specs=[
                pl.BlockSpec((tn, C), logits_map),   # full-C, native dtype
                pl.BlockSpec((tn, 1), targets_map),
            ],
            out_specs=pl.BlockSpec((1, 8, 128), lambda s, i: (s, 0, 0)),
        ),
        compiler_params=pltpu.CompilerParams(
            dimension_semantics=("parallel", "arbitrary"),
            vmem_limit_bytes=vmem_limit,
        ),
    )(logits, targets)

    total = jnp.sum(partials[:, 0, 0])
    count = jnp.sum(partials[:, 1, 0])
    # count == 0 (all targets ignored) yields NaN, matching torch's
    # CrossEntropyLoss(reduction='mean') behavior.
    return {'loss': total / count}


def _reference_loss(predicts, label, ignore_index=IGNORE_INDEX):
    """Pure-JAX reference (mirrors torch.nn.CrossEntropyLoss with ignore_index)."""
    predict = predicts[:, :-1, :]
    label = label.astype(jnp.int32)[:, 1:]
    num_classes = predict.shape[-1]
    inputs = jnp.reshape(predict, (-1, num_classes)).astype(jnp.float32)
    targets = jnp.reshape(label, (-1,))
    logp = jax.nn.log_softmax(inputs, axis=-1)
    nll = -jnp.take_along_axis(logp, targets[:, None], axis=-1)[:, 0]
    valid = (targets != ignore_index).astype(jnp.float32)
    return jnp.sum(nll * valid) / jnp.sum(valid)


if __name__ == "__main__":
    key = jax.random.PRNGKey(0)
    k1, k2 = jax.random.split(key)

    B, T, C = 2, 8, 96  # small shapes; C > ignore_index so padding class exists
    predicts = jax.random.normal(k1, (B, T, C), dtype=jnp.float32)
    label = jax.random.randint(k2, (B, T), 0, C, dtype=jnp.int32)
    # force at least one ignored position to exercise the ignore_index mask
    label = label.at[0, 3].set(IGNORE_INDEX)

    out = sar_loss(predicts, label)
    loss = jax.block_until_ready(out['loss'])

    ref = jax.block_until_ready(_reference_loss(predicts, label))
    assert jnp.allclose(loss, ref, rtol=1e-5, atol=1e-5), (loss, ref)

    print("KERNEL_OK")
</pallas_src>

<mosaic_0001>
module attributes {stable_mosaic.version = 11 : i64} {
  func.func @_sar_loss_kernel(%arg0: i32, %arg1: i32, %arg2: memref<16x96xf32, #tpu.memory_space<vmem>>, %arg3: memref<16x1xi32, #tpu.memory_space<vmem>>, %arg4: memref<1x8x128xf32, #tpu.memory_space<vmem>>) attributes {dimension_semantics = [#tpu.dimension_semantics<parallel>, #tpu.dimension_semantics<arbitrary>], iteration_bounds = array<i64: 1, 1>, scalar_prefetch = 0 : i64, scratch_operands = 0 : i64, tpu.core_type = #tpu.core_type<tc>, window_params = [{transform_indices = @transform_0, window_bounds = array<i64: 16, 96>}, {transform_indices = @transform_1, window_bounds = array<i64: 16, 1>}, {transform_indices = @transform_2, window_bounds = array<i64: 1, 8, 128>}]} {
    %c0_i32 = arith.constant 0 : i32
    %0 = arith.cmpi eq, %arg1, %c0_i32 : i32
    %1 = arith.extui %0 : i1 to i32
    %c0_i32_0 = arith.constant 0 : i32
    %2 = arith.cmpi ne, %1, %c0_i32_0 : i32
    scf.if %2 {
      %cst_20 = arith.constant 0.000000e+00 : f32
      %51 = vector.broadcast %cst_20 : f32 to vector<1x8x128xf32>
      %c0_21 = arith.constant 0 : index
      %c0_22 = arith.constant 0 : index
      %c0_23 = arith.constant 0 : index
      %52 = vector.load %arg4[%c0_21, %c0_22, %c0_23] : memref<1x8x128xf32, #tpu.memory_space<vmem>>, vector<1x8x128xf32>
      tpu.vector_store %arg4[%c0_21, %c0_22, %c0_23], %51 {strides = array<i32>} : memref<1x8x128xf32, #tpu.memory_space<vmem>>, vector<1x8x128xf32>,
    } else {
    }
    %3 = tpu.iota {dimensions = array<i32: 1>} : vector<16x96xi32>
    %c0 = arith.constant 0 : index
    %c0_1 = arith.constant 0 : index
    %4 = vector.load %arg2[%c0, %c0_1] : memref<16x96xf32, #tpu.memory_space<vmem>>, vector<16x96xf32>
    %c0_2 = arith.constant 0 : index
    %c0_3 = arith.constant 0 : index
    %5 = vector.load %arg3[%c0_2, %c0_3] : memref<16x1xi32, #tpu.memory_space<vmem>>, vector<16x1xi32>
    %cst = arith.constant dense<0xFF800000> : vector<16xf32>
    %6 = vector.multi_reduction <maximumf>, %4, %cst [1] : vector<16x96xf32> to vector<16xf32>
    %7 = vector.shape_cast %6 : vector<16xf32> to vector<16x1xf32>
    %8 = vector.broadcast %7 : vector<16x1xf32> to vector<16x96xf32>
    %9 = arith.subf %4, %8 : vector<16x96xf32>
    %10 = math.exp %9 : vector<16x96xf32>
    %cst_4 = arith.constant dense<0.000000e+00> : vector<16xf32>
    %11 = vector.multi_reduction <add>, %10, %cst_4 [1] : vector<16x96xf32> to vector<16xf32>
    %12 = vector.shape_cast %11 : vector<16xf32> to vector<16x1xf32>
    %13 = math.log %12 : vector<16x1xf32>
    %14 = vector.broadcast %5 : vector<16x1xi32> to vector<16x96xi32>
    %15 = arith.cmpi eq, %3, %14 : vector<16x96xi32>
    %cst_5 = arith.constant 0.000000e+00 : f32
    %16 = vector.broadcast %cst_5 : f32 to vector<16x96xf32>
    %17 = arith.select %15, %4, %16 : vector<16x96xi1>, vector<16x96xf32>
    %cst_6 = arith.constant dense<0.000000e+00> : vector<16xf32>
    %18 = vector.multi_reduction <add>, %17, %cst_6 [1] : vector<16x96xf32> to vector<16xf32>
    %19 = vector.shape_cast %18 : vector<16xf32> to vector<16x1xf32>
    %20 = arith.addf %7, %13 : vector<16x1xf32>
    %21 = arith.subf %20, %19 : vector<16x1xf32>
    %c92_i32 = arith.constant 92 : i32
    %22 = vector.broadcast %c92_i32 : i32 to vector<16x1xi32>
    %23 = arith.cmpi ne, %5, %22 : vector<16x1xi32>
    %cst_7 = arith.constant 0.000000e+00 : f32
    %24 = vector.broadcast %cst_7 : f32 to vector<16x1xf32>
    %25 = arith.select %23, %21, %24 : vector<16x1xi1>, vector<16x1xf32>
    %26 = vector.shape_cast %25 : vector<16x1xf32> to vector<1x16x1xf32>
    %cst_8 = arith.constant dense<0.000000e+00> : vector<1xf32>
    %27 = vector.multi_reduction <add>, %26, %cst_8 [1, 2] : vector<1x16x1xf32> to vector<1xf32>
    %28 = vector.shape_cast %27 : vector<1xf32> to vector<1x1x1xf32>
    %29 = vector.extract %28[0, 0, 0] : f32 from vector<1x1x1xf32>
    %cst_9 = arith.constant 0.000000e+00 : f32
    %30 = arith.addf %cst_9, %29 : f32
    %31 = arith.extui %23 : vector<16x1xi1> to vector<16x1xi32>
    %32 = arith.sitofp %31 : vector<16x1xi32> to vector<16x1xf32>
    %33 = vector.shape_cast %32 : vector<16x1xf32> to vector<1x16x1xf32>
    %cst_10 = arith.constant dense<0.000000e+00> : vector<1xf32>
    %34 = vector.multi_reduction <add>, %33, %cst_10 [1, 2] : vector<1x16x1xf32> to vector<1xf32>
    %35 = vector.shape_cast %34 : vector<1xf32> to vector<1x1x1xf32>
    %36 = vector.extract %35[0, 0, 0] : f32 from vector<1x1x1xf32>
    %cst_11 = arith.constant 0.000000e+00 : f32
    %37 = arith.addf %cst_11, %36 : f32
    %38 = tpu.iota {dimensions = array<i32: 1>} : vector<1x8x128xi32>
    %c0_i32_12 = arith.constant 0 : i32
    %39 = vector.broadcast %c0_i32_12 : i32 to vector<1x8x128xi32>
    %40 = arith.cmpi eq, %38, %39 : vector<1x8x128xi32>
    %c1_i32 = arith.constant 1 : i32
    %41 = vector.broadcast %c1_i32 : i32 to vector<1x8x128xi32>
    %42 = arith.cmpi eq, %38, %41 : vector<1x8x128xi32>
    %cst_13 = arith.constant 0.000000e+00 : f32
    %43 = vector.broadcast %37 : f32 to vector<1x8x128xf32>
    %44 = vector.broadcast %cst_13 : f32 to vector<1x8x128xf32>
    %45 = arith.select %42, %43, %44 : vector<1x8x128xi1>, vector<1x8x128xf32>
    %46 = vector.broadcast %30 : f32 to vector<1x8x128xf32>
    %47 = arith.select %40, %46, %45 : vector<1x8x128xi1>, vector<1x8x128xf32>
    %c0_14 = arith.constant 0 : index
    %c0_15 = arith.constant 0 : index
    %c0_16 = arith.constant 0 : index
    %48 = vector.load %arg4[%c0_14, %c0_15, %c0_16] : memref<1x8x128xf32, #tpu.memory_space<vmem>>, vector<1x8x128xf32>
    %49 = arith.addf %48, %47 : vector<1x8x128xf32>
    %c0_17 = arith.constant 0 : index
    %c0_18 = arith.constant 0 : index
    %c0_19 = arith.constant 0 : index
    %50 = vector.load %arg4[%c0_17, %c0_18, %c0_19] : memref<1x8x128xf32, #tpu.memory_space<vmem>>, vector<1x8x128xf32>
    tpu.vector_store %arg4[%c0_17, %c0_18, %c0_19], %49 {strides = array<i32>} : memref<1x8x128xf32, #tpu.memory_space<vmem>>, vector<1x8x128xf32>,
    return
  }
  func.func @transform_0(%arg0: i32, %arg1: i32) -> (i32, i32) {
    %c1_i32 = arith.constant 1 : i32
    %0 = arith.muli %arg0, %c1_i32 : i32
    %1 = arith.addi %0, %arg1 : i32
    %c0_i32 = arith.constant 0 : i32
    %2 = arith.minsi %1, %c0_i32 : i32
    %c0_i32_0 = arith.constant 0 : i32
    %c0_i32_1 = arith.constant 0 : i32
    return %2, %c0_i32_0 : i32, i32
  }
  func.func @transform_1(%arg0: i32, %arg1: i32) -> (i32, i32) {
    %c1_i32 = arith.constant 1 : i32
    %0 = arith.muli %arg0, %c1_i32 : i32
    %1 = arith.addi %0, %arg1 : i32
    %c0_i32 = arith.constant 0 : i32
    %c0_i32_0 = arith.constant 0 : i32
    return %1, %c0_i32 : i32, i32
  }
  func.func @transform_2(%arg0: i32, %arg1: i32) -> (i32, i32, i32) {
    %c0_i32 = arith.constant 0 : i32
    %c0_i32_0 = arith.constant 0 : i32
    %c0_i32_1 = arith.constant 0 : i32
    return %arg0, %c0_i32, %c0_i32_0 : i32, i32, i32
  }
}

</mosaic_0001>

<llo_original>
// kernel: tpu_custom_call.1
$region0: #{tpu_custom_call.1}
  #allocation0 [shape = 'u32[]', space=smem, size = 0x4, offset = 0x4, fixed_abs, tag = 'smem constant byte address 0x4 - core index']
  #allocation1 [shape = 'u32[72,128]{1,0:T(1,128)}', space=vmem, size = 0x9000, scoped, tag = 'internal scratch']
  %s0 = inlined_call_operand.vmem [shape: f32[16,96], index: 0, kind: input, shape index: {}]
  %s1 = inlined_call_operand.vmem [shape: s32[16,1], index: 1, kind: input, shape index: {}]
  %s2 = inlined_call_operand.hbm [shape: f32[1,8,128], index: 2, kind: output, shape index: {}]
  %s3 = sld [smem:[#allocation0]]
  $region22: #{tpu_custom_call.1} parent=0
    _
  %s5 = ssub.s32 1, %s3
  %s6 = scalar_select 0, %s5, %s3
  $region1: #{tpu_custom_call.1} parent=0
    #allocation2 [shape = 'u8[4096]{0}', space=vmem, size = 0x1000, scoped, tag = 'output window, operand 0, single buffered']
    #allocation3 [shape = 's32[1]{0}', space=sflag, size = 0x4, scoped, tag = 'scoped memory for tpu_custom_call.1']
    %7 = vsyncpa [#allocation3], 0
    // Predicated region
    $region2: #{tpu_custom_call.1} parent=1 // pred_check
      _
    $region3: #{tpu_custom_call.1} parent=1 // pred_check_branch
      %9 = sbr.rel (0) target = $region5
    $region4: #{tpu_custom_call.1} parent=1 // pred_region
      %s10 = sadd.s32 0, 0
      %p11 = scmp.lt.s32.totalorder %s10, 0
      %s12 = scalar_select %p11, %s10, 0
      %s13 = smul.u32 2, %s12
      %p14 = scmp.lt.s32.totalorder %s13, 1
      %s15 = scalar_select %p14, %s13, 1
      %s16 = smul.addr %s15, 8
      %s17 = scalar_lea.vmem %s0, %s16
      %s18 = sadd.s32 0, 0
      %p19 = scmp.lt.s32.totalorder %s18, 0
      %s20 = scalar_select %p19, %s18, 0
      %s21 = smul.u32 2, %s20
    $region5: #{tpu_custom_call.1} parent=1 // pred_fallthru
      _
    // Predicated region
    $region6: #{tpu_custom_call.1} parent=1 // pred_check
      _
    $region7: #{tpu_custom_call.1} parent=1 // pred_check_branch
      %23 = sbr.rel (0) target = $region9
    $region8: #{tpu_custom_call.1} parent=1 // pred_region
      %s24 = sadd.s32 0, 0
      %s25 = smul.u32 2, %s24
      %p26 = scmp.lt.s32.totalorder %s25, 1
      %s27 = scalar_select %p26, %s25, 1
      %s28 = smul.addr %s27, 8
      %s29 = scalar_lea.vmem %s1, %s28
      %s30 = sadd.s32 0, 0
      %s31 = smul.u32 2, %s30
    $region9: #{tpu_custom_call.1} parent=1 // pred_fallthru
      _
    %s32 = sadd.s32 0, 0
    %p33 = scmp.lt.s32.totalorder %s32, 0
    %s34 = scalar_select %p33, %s32, 0
    %s35 = smul.u32 2, %s34
    %p36 = scmp.lt.s32.totalorder %s35, 1
    %s37 = scalar_select %p36, %s35, 1
    %s38 = smul.addr %s37, 8
    %s39 = scalar_lea.vmem %s0, %s38
    %s40 = sadd.s32 0, 0
    %s41 = smul.u32 2, %s40
    %p42 = scmp.lt.s32.totalorder %s41, 1
    %s43 = scalar_select %p42, %s41, 1
    %s44 = smul.addr %s43, 8
    %s45 = scalar_lea.vmem %s1, %s44
    %s46 = sadd.s32 0, 0
    %p47 = scmp.lt.s32.totalorder %s46, 0
    %s48 = scalar_select %p47, %s46, 0
    %s49 = smul.u32 2, %s48
    %p50 = scmp.lt.s32.totalorder %s49, 1
    %s51 = scalar_select %p50, %s49, 1
    %s52 = smul.addr %s51, 8
    %s53 = scalar_lea.vmem %s0, %s52
    %s54 = sadd.s32 0, 0
    %p55 = scmp.lt.s32.totalorder %s54, 0
    %s56 = scalar_select %p55, %s54, 0
    %s57 = smul.u32 2, %s56
    %s58 = sadd.s32 0, 0
    %s59 = smul.u32 2, %s58
    %p60 = scmp.lt.s32.totalorder %s59, 1
    %s61 = scalar_select %p60, %s59, 1
    %s62 = smul.addr %s61, 8
    %s63 = scalar_lea.vmem %s1, %s62
    %s64 = sadd.s32 0, 0
    %s65 = smul.u32 2, %s64
    %p66 = scmp.eq.s32.totalorder 0, 0
    // Predicated region
    $region10: #{tpu_custom_call.1} parent=1 // pred_check
      %p67 = pneg %p66
    $region11: #{tpu_custom_call.1} parent=1 // pred_check_branch
      %69 = sbr.rel (%p67) target = $region13
    $region12: #{tpu_custom_call.1} parent=1 // pred_region
      %70 = vst [vmem:[#allocation2] sm:$0xff] 0.0
    $region13: #{tpu_custom_call.1} parent=1 // pred_fallthru
      _
    %v71 = vlaneseq
    %v72 = vand.u32 %v71, 127
    %v73 = vld [vmem:[%s53] sm:$0xff]
    %v74 = vld [vmem:[%s53 + $0x8] sm:$0xff]
    %v75 = vld [vmem:[%s63] sm:$0xff]
    %v76 = vld [vmem:[%s63 + $0x8] sm:$0xff]
    %vm77 = vcmask 785408
    %v78 = vsel %vm77, %v73, -inf
    %79 = vmax.xlane.f32.xlu0 %v78
    %v80 = vpop.xlane.xlu0 %79
    %v81 = vsel %vm77, %v74, -inf
    %82 = vmax.xlane.f32.xlu0 %v81
    %v83 = vpop.xlane.xlu0 %82
    %v84 = vsub.f32 %v73, %v80
    %v85 = vsub.f32 %v74, %v83
    %v86 = vmul.f32 %v84, 1.442695
    %v87 = vpow.pop %v86
    %v88 = vmul.f32 %v85, 1.442695
    %v89 = vpow.pop %v88
    %v90 = vsel %vm77, %v87, 0.0
    %91 = vadd.xlane.f32.xlu0 %v90
    %v92 = vpop.xlane.xlu0 %91
    %v93 = vsel %vm77, %v89, 0.0
    %94 = vadd.xlane.f32.xlu0 %v93
    %v95 = vpop.xlane.xlu0 %94
    %v96 = vlog2.pop %v92
    %v97 = vmul.f32 %v96, 0.6931472
    %v98 = vlog2.pop %v95
    %v99 = vmul.f32 %v98, 0.6931472
    %100 = vset.pattern.permute.xlu0 0
    %101 = vperm.xlu0 %100, %v75
    %v102 = vpop.permute.xlu0 %101
    %103 = vset.pattern.permute.xlu0 0
    %104 = vperm.xlu0 %103, %v76
    %v105 = vpop.permute.xlu0 %104
    %vm106 = vcmp.eq.s32.totalorder %v72, %v102
    %vm107 = vcmp.eq.s32.totalorder %v72, %v105
    %v108 = vsel %vm106, %v73, 0.0
    %v109 = vsel %vm107, %v74, 0.0
    %v110 = vsel %vm77, %v108, 0.0
    %111 = vadd.xlane.f32.xlu0 %v110
    %v112 = vpop.xlane.xlu0 %111
    %v113 = vsel %vm77, %v109, 0.0
    %114 = vadd.xlane.f32.xlu0 %v113
    %v115 = vpop.xlane.xlu0 %114
    %v116 = vadd.f32 %v80, %v97
    %v117 = vadd.f32 %v83, %v99
    %v118 = vsub.f32 %v116, %v112
    %v119 = vsub.f32 %v117, %v115
    %vm120 = vcmp.ne.s32.totalorder %v75, 92
    %vm121 = vcmp.ne.s32.totalorder %v76, 92
    %v122 = vsel %vm120, %v118, 0.0
    %v123 = vsel %vm121, %v119, 0.0
    %vm124 = vcmask 7168
    %v125 = vsel %vm124, %v122, 0.0
    %v126 = vsel %vm124, %v123, 0.0
    %v127 = vadd.f32 %v125, %v126
    %128 = vadd.xlane.f32.xlu0 %v127
    %v129 = vpop.xlane.xlu0 %128
    %v130 = vrot.slane %v129, 4
    %v131 = vadd.f32 %v129, %v130
    %v132 = vrot.slane %v131, 2
    %v133 = vadd.f32 %v131, %v132
    %v134 = vrot.slane %v133, 1
    %v135 = vadd.f32 %v133, %v134
    %s136 = vtos %v135
    %s137 = sadd.f32 %s136, 0.0
    %v138 = vsel %vm120, 1, 0
    %v139 = vsel %vm121, 1, 0
    %v140 = vcvt.s32.f32 %v138
    %v141 = vcvt.s32.f32 %v139
    %v142 = vsel %vm124, %v140, 0.0
    %v143 = vsel %vm124, %v141, 0.0
    %v144 = vadd.f32 %v142, %v143
    %145 = vadd.xlane.f32.xlu0 %v144
    %v146 = vpop.xlane.xlu0 %145
    %v147 = vrot.slane %v146, 4
    %v148 = vadd.f32 %v146, %v147
    %v149 = vrot.slane %v148, 2
    %v150 = vadd.f32 %v148, %v149
    %v151 = vrot.slane %v150, 1
    %v152 = vadd.f32 %v150, %v151
    %s153 = vtos %v152
    %s154 = sadd.f32 %s153, 0.0
    %v155 = vlaneseq
    %v156 = vshrl.u32 %v155, 7
    %vm157 = vcmp.eq.s32.totalorder %v156, 0
    %vm158 = vcmp.eq.s32.totalorder %v156, 1
    %v159 = vstv %s154
    %v160 = vsel %vm158, %v159, 0.0
    %v161 = vstv %s137
    %v162 = vsel %vm157, %v161, %v160
    %v163 = vld [vmem:[#allocation2] sm:$0xff]
    %v164 = vadd.f32 %v163, %v162
    %165 = vst [vmem:[#allocation2] sm:$0xff] %v164
    // Predicated region
    $region14: #{tpu_custom_call.1} parent=1 // pred_check
      _
    $region15: #{tpu_custom_call.1} parent=1 // pred_check_branch
      %167 = sbr.rel (0) target = $region17
    $region16: #{tpu_custom_call.1} parent=1 // pred_region
      %169 = vsyncadd [#allocation3], 0
      %s171 = sshll.u32 [#allocation2], 4
      %s172 = int_to_ptr.vmem [resolvable:$true] %s171
      %s173 = sshll.u32 %s2, 4
      %s174 = int_to_ptr.hbm [resolvable:$true] %s173
      %176 = dma.vmem_to_hbm [thread:$0]  %s172, 128, %s174, [#allocation3]
    $region17: #{tpu_custom_call.1} parent=1 // pred_fallthru
      _
    // Predicated region
    $region18: #{tpu_custom_call.1} parent=1 // pred_check
      _
    $region19: #{tpu_custom_call.1} parent=1 // pred_check_branch
      %178 = sbr.rel (0) target = $region21
    $region20: #{tpu_custom_call.1} parent=1 // pred_region
      %180 = dma.done [#allocation3], 128
    $region21: #{tpu_custom_call.1} parent=1 // pred_fallthru
      _
    %181 = vsyncpa [#allocation3], 1

</llo_original>
